<compile_context>
chip_gen: v5e
topology: v5e:2x2
jax: 0.10.0
libtpu: 0.0.40
codegen_flags: <defaults>
</compile_context>

<pallas_src>
import functools

import jax
import jax.numpy as jnp
from jax.experimental import pallas as pl
from jax.experimental.pallas import tpu as pltpu


def _round_up(v, mult):
    return ((v + mult - 1) // mult) * mult


def _lora_linear_kernel(x_ref, wt_ref, b_ref, a_ref, bb_ref, o_ref,
                        acc_ref, xa_ref, *, alpha):
    # Grid: (i over M tiles, j over N tiles, k over K tiles); K innermost.
    # x_ref : (tm, tk)   input tile
    # wt_ref: (tk, tn)   pre-transposed weight tile (K, N layout)
    # b_ref : (1, tn)    bias tile
    # a_ref : (tk, r)    LoRA A tile (K-tiled)
    # bb_ref: (r, tn)    LoRA B tile
    # acc_ref: (tm, tn) f32 accumulator, xa_ref: (tm, r) f32 LoRA accumulator
    k = pl.program_id(2)

    @pl.when(k == 0)
    def _():
        acc_ref[...] = jnp.zeros_like(acc_ref)
        xa_ref[...] = jnp.zeros_like(xa_ref)

    x = x_ref[...]

    # Base GEMM partial: (tm, tk) @ (tk, tn) on the MXU, f32 accumulate.
    acc_ref[...] += jnp.dot(x, wt_ref[...], preferred_element_type=jnp.float32)

    # LoRA low-rank partial: (tm, tk) @ (tk, r) -- tiny, stays out of hot loop
    # epilogue math.
    xa_ref[...] += jnp.dot(x, a_ref[...], preferred_element_type=jnp.float32)

    @pl.when(k == pl.num_programs(2) - 1)
    def _():
        # Fold alpha into the small (tm, r) operand, not the (tm, tn) product.
        xa = (alpha * xa_ref[...]).astype(bb_ref.dtype)
        lora = jnp.dot(xa, bb_ref[...], preferred_element_type=jnp.float32)
        y = acc_ref[...] + lora + b_ref[...].astype(jnp.float32)
        o_ref[...] = y.astype(o_ref.dtype)


def linear_with_lora(x, w, b, lora_a, lora_b, alpha, *, tm=256, tn=256, tk=256):
    """x: (..., in_features) -> (..., out_features).

    w: (out_features, in_features), b: (out_features,),
    lora_a: (in_features, rank), lora_b: (rank, out_features).
    """
    *lead, k = x.shape
    n = w.shape[0]
    r = lora_a.shape[1]

    x2 = x.reshape(-1, k)
    m = x2.shape[0]

    # Tile sizes: capped at (padded) problem dims; sublane/lane aligned.
    tm = min(tm, _round_up(m, 8))
    tn = min(tn, _round_up(n, 128))
    tk = min(tk, _round_up(k, 128))
    m_pad = _round_up(m, tm)
    n_pad = _round_up(n, tn)
    k_pad = _round_up(k, tk)
    r_pad = _round_up(max(r, 8), 8)

    # Zero-padding keeps the math exact (padded rows/cols contribute 0).
    x_p = jnp.pad(x2, ((0, m_pad - m), (0, k_pad - k)))
    wt_p = jnp.pad(w.T, ((0, k_pad - k), (0, n_pad - n)))          # (K, N)
    b_p = jnp.pad(b.reshape(1, n), ((0, 0), (0, n_pad - n)))
    a_p = jnp.pad(lora_a, ((0, k_pad - k), (0, r_pad - r)))
    bb_p = jnp.pad(lora_b, ((0, r_pad - r), (0, n_pad - n)))

    grid = (m_pad // tm, n_pad // tn, k_pad // tk)
    kernel = functools.partial(_lora_linear_kernel, alpha=float(alpha))

    out = pl.pallas_call(
        kernel,
        out_shape=jax.ShapeDtypeStruct((m_pad, n_pad), x.dtype),
        grid_spec=pltpu.PrefetchScalarGridSpec(
            num_scalar_prefetch=0,
            grid=grid,
            in_specs=[
                pl.BlockSpec((tm, tk), lambda i, j, kk: (i, kk)),      # x
                pl.BlockSpec((tk, tn), lambda i, j, kk: (kk, j)),      # W^T
                pl.BlockSpec((1, tn), lambda i, j, kk: (0, j)),        # bias
                pl.BlockSpec((tk, r_pad), lambda i, j, kk: (kk, 0)),   # LoRA A
                pl.BlockSpec((r_pad, tn), lambda i, j, kk: (0, j)),    # LoRA B
            ],
            out_specs=pl.BlockSpec((tm, tn), lambda i, j, kk: (i, j)),
            scratch_shapes=[
                pltpu.VMEM((tm, tn), jnp.float32),     # base GEMM accumulator
                pltpu.VMEM((tm, r_pad), jnp.float32),  # LoRA xa accumulator
            ],
        ),
        compiler_params=pltpu.CompilerParams(
            dimension_semantics=("parallel", "parallel", "arbitrary")),
    )(x_p, wt_p, b_p, a_p, bb_p)

    out = out[:m, :n]
    return out.reshape(*lead, n)


if __name__ == "__main__":
    # Small shapes implied by the module: a token batch through a Linear.
    batch, seq = 2, 8
    in_features, out_features = 32, 32
    rank, alpha = 4, 2.0

    key = jax.random.PRNGKey(0)
    kx, kw, kb, ka, kbb = jax.random.split(key, 5)

    x = jax.random.normal(kx, (batch, seq, in_features), dtype=jnp.float32)

    # nn.Linear params
    w = jax.random.normal(kw, (out_features, in_features), dtype=jnp.float32) * 0.1
    b = jax.random.normal(kb, (out_features,), dtype=jnp.float32) * 0.1

    # LoRALayer params: A ~ N(0,1)/sqrt(rank); B is zeros in the reference
    # init, randomized here so the LoRA path actually exercises the kernel.
    lora_a = jax.random.normal(ka, (in_features, rank), dtype=jnp.float32) / jnp.sqrt(rank)
    lora_b = jax.random.normal(kbb, (rank, out_features), dtype=jnp.float32) * 0.05

    y = linear_with_lora(x, w, b, lora_a, lora_b, alpha)
    y = jax.block_until_ready(y)

    # Pure-JAX reference for correctness.
    y_ref = x @ w.T + b + alpha * ((x @ lora_a) @ lora_b)
    assert y.shape == (batch, seq, out_features)
    assert jnp.allclose(y, y_ref, atol=1e-4, rtol=1e-4), "mismatch vs reference"

    print("KERNEL_OK")
</pallas_src>

<mosaic_0001>
module attributes {stable_mosaic.version = 11 : i64} {
  func.func @_lora_linear_kernel(%arg0: i32, %arg1: i32, %arg2: i32, %arg3: memref<16x128xf32, #tpu.memory_space<vmem>>, %arg4: memref<128x128xf32, #tpu.memory_space<vmem>>, %arg5: memref<1x128xf32, #tpu.memory_space<vmem>>, %arg6: memref<128x8xf32, #tpu.memory_space<vmem>>, %arg7: memref<8x128xf32, #tpu.memory_space<vmem>>, %arg8: memref<16x128xf32, #tpu.memory_space<vmem>>, %arg9: memref<16x128xf32, #tpu.memory_space<vmem>>, %arg10: memref<16x8xf32, #tpu.memory_space<vmem>>) attributes {dimension_semantics = [#tpu.dimension_semantics<parallel>, #tpu.dimension_semantics<parallel>, #tpu.dimension_semantics<arbitrary>], iteration_bounds = array<i64: 1, 1, 1>, scalar_prefetch = 0 : i64, scratch_operands = 2 : i64, tpu.core_type = #tpu.core_type<tc>, window_params = [{transform_indices = @transform_0, window_bounds = array<i64: 16, 128>}, {transform_indices = @transform_1, window_bounds = array<i64: 128, 128>}, {transform_indices = @transform_2, window_bounds = array<i64: 1, 128>}, {transform_indices = @transform_3, window_bounds = array<i64: 128, 8>}, {transform_indices = @transform_4, window_bounds = array<i64: 8, 128>}, {transform_indices = @transform_5, window_bounds = array<i64: 16, 128>}]} {
    %c0_i32 = arith.constant 0 : i32
    %0 = arith.cmpi eq, %arg2, %c0_i32 : i32
    %1 = arith.extui %0 : i1 to i32
    %c0_i32_0 = arith.constant 0 : i32
    %2 = arith.cmpi ne, %1, %c0_i32_0 : i32
    scf.if %2 {
      %cst_17 = arith.constant 0.000000e+00 : f32
      %17 = vector.broadcast %cst_17 : f32 to vector<16x128xf32>
      %c0_18 = arith.constant 0 : index
      %c0_19 = arith.constant 0 : index
      %18 = vector.load %arg9[%c0_18, %c0_19] : memref<16x128xf32, #tpu.memory_space<vmem>>, vector<16x128xf32>
      tpu.vector_store %arg9[%c0_18, %c0_19], %17 {strides = array<i32>} : memref<16x128xf32, #tpu.memory_space<vmem>>, vector<16x128xf32>,
      %cst_20 = arith.constant 0.000000e+00 : f32
      %19 = vector.broadcast %cst_20 : f32 to vector<16x8xf32>
      %c0_21 = arith.constant 0 : index
      %c0_22 = arith.constant 0 : index
      %20 = vector.load %arg10[%c0_21, %c0_22] : memref<16x8xf32, #tpu.memory_space<vmem>>, vector<16x8xf32>
      tpu.vector_store %arg10[%c0_21, %c0_22], %19 {strides = array<i32>} : memref<16x8xf32, #tpu.memory_space<vmem>>, vector<16x8xf32>,
    } else {
    }
    %c0 = arith.constant 0 : index
    %c0_1 = arith.constant 0 : index
    %3 = vector.load %arg3[%c0, %c0_1] : memref<16x128xf32, #tpu.memory_space<vmem>>, vector<16x128xf32>
    %c0_2 = arith.constant 0 : index
    %c0_3 = arith.constant 0 : index
    %4 = vector.load %arg9[%c0_2, %c0_3] : memref<16x128xf32, #tpu.memory_space<vmem>>, vector<16x128xf32>
    %c0_4 = arith.constant 0 : index
    %c0_5 = arith.constant 0 : index
    %5 = vector.load %arg4[%c0_4, %c0_5] : memref<128x128xf32, #tpu.memory_space<vmem>>, vector<128x128xf32>
    %cst = arith.constant dense<0.000000e+00> : vector<16x128xf32>
    %6 = tpu.matmul %3, %5, %cst {dimension_numbers = #tpu.dot_dimension_numbers<[1], [0], [0], [1], [0, 0, 1, 1], [], []>} : vector<16x128xf32>, vector<128x128xf32>, vector<16x128xf32> -> vector<16x128xf32>
    %7 = arith.addf %4, %6 : vector<16x128xf32>
    %c0_6 = arith.constant 0 : index
    %c0_7 = arith.constant 0 : index
    %8 = vector.load %arg9[%c0_6, %c0_7] : memref<16x128xf32, #tpu.memory_space<vmem>>, vector<16x128xf32>
    tpu.vector_store %arg9[%c0_6, %c0_7], %7 {strides = array<i32>} : memref<16x128xf32, #tpu.memory_space<vmem>>, vector<16x128xf32>,
    %c0_8 = arith.constant 0 : index
    %c0_9 = arith.constant 0 : index
    %9 = vector.load %arg10[%c0_8, %c0_9] : memref<16x8xf32, #tpu.memory_space<vmem>>, vector<16x8xf32>
    %c0_10 = arith.constant 0 : index
    %c0_11 = arith.constant 0 : index
    %10 = vector.load %arg6[%c0_10, %c0_11] : memref<128x8xf32, #tpu.memory_space<vmem>>, vector<128x8xf32>
    %cst_12 = arith.constant dense<0.000000e+00> : vector<16x8xf32>
    %11 = tpu.matmul %3, %10, %cst_12 {dimension_numbers = #tpu.dot_dimension_numbers<[1], [0], [0], [1], [0, 0, 1, 1], [], []>} : vector<16x128xf32>, vector<128x8xf32>, vector<16x8xf32> -> vector<16x8xf32>
    %12 = arith.addf %9, %11 : vector<16x8xf32>
    %c0_13 = arith.constant 0 : index
    %c0_14 = arith.constant 0 : index
    %13 = vector.load %arg10[%c0_13, %c0_14] : memref<16x8xf32, #tpu.memory_space<vmem>>, vector<16x8xf32>
    tpu.vector_store %arg10[%c0_13, %c0_14], %12 {strides = array<i32>} : memref<16x8xf32, #tpu.memory_space<vmem>>, vector<16x8xf32>,
    %c0_i32_15 = arith.constant 0 : i32
    %14 = arith.cmpi eq, %arg2, %c0_i32_15 : i32
    %15 = arith.extui %14 : i1 to i32
    %c0_i32_16 = arith.constant 0 : i32
    %16 = arith.cmpi ne, %15, %c0_i32_16 : i32
    scf.if %16 {
      %c0_17 = arith.constant 0 : index
      %c0_18 = arith.constant 0 : index
      %17 = vector.load %arg10[%c0_17, %c0_18] : memref<16x8xf32, #tpu.memory_space<vmem>>, vector<16x8xf32>
      %cst_19 = arith.constant 2.000000e+00 : f32
      %18 = vector.broadcast %cst_19 : f32 to vector<16x8xf32>
      %19 = arith.mulf %18, %17 : vector<16x8xf32>
      %c0_20 = arith.constant 0 : index
      %c0_21 = arith.constant 0 : index
      %20 = vector.load %arg7[%c0_20, %c0_21] : memref<8x128xf32, #tpu.memory_space<vmem>>, vector<8x128xf32>
      %cst_22 = arith.constant dense<0.000000e+00> : vector<16x128xf32>
      %21 = tpu.matmul %19, %20, %cst_22 {dimension_numbers = #tpu.dot_dimension_numbers<[1], [0], [0], [1], [0, 0, 1, 1], [], []>} : vector<16x8xf32>, vector<8x128xf32>, vector<16x128xf32> -> vector<16x128xf32>
      %c0_23 = arith.constant 0 : index
      %c0_24 = arith.constant 0 : index
      %22 = vector.load %arg9[%c0_23, %c0_24] : memref<16x128xf32, #tpu.memory_space<vmem>>, vector<16x128xf32>
      %23 = arith.addf %22, %21 : vector<16x128xf32>
      %c0_25 = arith.constant 0 : index
      %c0_26 = arith.constant 0 : index
      %24 = vector.load %arg5[%c0_25, %c0_26] : memref<1x128xf32, #tpu.memory_space<vmem>>, vector<1x128xf32>
      %25 = vector.broadcast %24 : vector<1x128xf32> to vector<16x128xf32>
      %26 = arith.addf %23, %25 : vector<16x128xf32>
      %c0_27 = arith.constant 0 : index
      %c0_28 = arith.constant 0 : index
      %27 = vector.load %arg8[%c0_27, %c0_28] : memref<16x128xf32, #tpu.memory_space<vmem>>, vector<16x128xf32>
      tpu.vector_store %arg8[%c0_27, %c0_28], %26 {strides = array<i32>} : memref<16x128xf32, #tpu.memory_space<vmem>>, vector<16x128xf32>,
    } else {
    }
    return
  }
  func.func @transform_0(%arg0: i32, %arg1: i32, %arg2: i32) -> (i32, i32) {
    %c0_i32 = arith.constant 0 : i32
    return %arg0, %arg2 : i32, i32
  }
  func.func @transform_1(%arg0: i32, %arg1: i32, %arg2: i32) -> (i32, i32) {
    %c0_i32 = arith.constant 0 : i32
    return %arg2, %arg1 : i32, i32
  }
  func.func @transform_2(%arg0: i32, %arg1: i32, %arg2: i32) -> (i32, i32) {
    %c0_i32 = arith.constant 0 : i32
    %c0_i32_0 = arith.constant 0 : i32
    return %c0_i32, %arg1 : i32, i32
  }
  func.func @transform_3(%arg0: i32, %arg1: i32, %arg2: i32) -> (i32, i32) {
    %c0_i32 = arith.constant 0 : i32
    %c0_i32_0 = arith.constant 0 : i32
    return %arg2, %c0_i32 : i32, i32
  }
  func.func @transform_4(%arg0: i32, %arg1: i32, %arg2: i32) -> (i32, i32) {
    %c0_i32 = arith.constant 0 : i32
    %c0_i32_0 = arith.constant 0 : i32
    return %c0_i32, %arg1 : i32, i32
  }
  func.func @transform_5(%arg0: i32, %arg1: i32, %arg2: i32) -> (i32, i32) {
    %c0_i32 = arith.constant 0 : i32
    return %arg0, %arg1 : i32, i32
  }
}

</mosaic_0001>

<llo_original>
// kernel: tpu_custom_call.1
$region0: #{tpu_custom_call.1}
  #allocation0 [shape = 'u32[]', space=smem, size = 0x4, offset = 0x4, fixed_abs, tag = 'smem constant byte address 0x4 - core index']
  #allocation1 [shape = 'u32[72,128]{1,0:T(1,128)}', space=vmem, size = 0x9000, scoped, tag = 'internal scratch']
  #allocation2 [shape = 'f32[16,128]{1,0:T(8,128)}', space=vmem, size = 0x2000, scoped, tag = 'scratch operand']
  #allocation3 [shape = 'f32[16,8]{1,0:T(8,128)}', space=vmem, size = 0x2000, scoped, tag = 'scratch operand']
  %s0 = inlined_call_operand.hbm [shape: f32[16,128], index: 0, kind: input, shape index: {}]
  %s1 = inlined_call_operand.vmem [shape: f32[128,128], index: 1, kind: input, shape index: {}]
  %s2 = inlined_call_operand.vmem [shape: f32[1,128], index: 2, kind: input, shape index: {}]
  %s3 = inlined_call_operand.vmem [shape: f32[128,8], index: 3, kind: input, shape index: {}]
  %s4 = inlined_call_operand.vmem [shape: f32[8,128], index: 4, kind: input, shape index: {}]
  %s5 = inlined_call_operand.hbm [shape: f32[16,128], index: 5, kind: output, shape index: {}]
  %s6 = sld [smem:[#allocation0]]
  $region42: #{tpu_custom_call.1} parent=0
    _
  %s8 = ssub.s32 1, %s6
  %s9 = scalar_select 0, %s8, %s6
  $region1: #{tpu_custom_call.1} parent=0
    #allocation4 [shape = 'u8[8192]{0}', space=vmem, size = 0x2000, scoped, tag = 'input window, operand 0, single buffered']
    #allocation5 [shape = 's32[1]{0}', space=sflag, size = 0x4, scoped, tag = 'scoped memory for tpu_custom_call.1']
    #allocation6 [shape = 's32[1]{0}', space=sflag, size = 0x4, scoped, tag = 'scoped memory for tpu_custom_call.1']
    #allocation7 [shape = 'u8[8192]{0}', space=vmem, size = 0x2000, scoped, tag = 'output window, operand 0, single buffered']
    %10 = vsyncpa [#allocation5], 0
    %11 = vsyncpa [#allocation6], 0
    // Predicated region
    $region2: #{tpu_custom_call.1} parent=1 // pred_check
      _
    $region3: #{tpu_custom_call.1} parent=1 // pred_check_branch
      %13 = sbr.rel (0) target = $region5
    $region4: #{tpu_custom_call.1} parent=1 // pred_region
      %15 = vsyncadd [#allocation5], 0
      %s16 = sshll.u32 %s0, 4
      %s17 = int_to_ptr.hbm [resolvable:$true] %s16
      %s18 = sshll.u32 [#allocation4], 4
      %s19 = int_to_ptr.vmem [resolvable:$true] %s18
      %24 = dma.hbm_to_vmem [thread:$0]  %s17, 256, %s19, [#allocation5], 128, 128, 8
    $region5: #{tpu_custom_call.1} parent=1 // pred_fallthru
      _
    // Predicated region
    $region6: #{tpu_custom_call.1} parent=1 // pred_check
      _
    $region7: #{tpu_custom_call.1} parent=1 // pred_check_branch
      %26 = sbr.rel (0) target = $region9
    $region8: #{tpu_custom_call.1} parent=1 // pred_region
      _
    $region9: #{tpu_custom_call.1} parent=1 // pred_fallthru
      _
    // Predicated region
    $region10: #{tpu_custom_call.1} parent=1 // pred_check
      _
    $region11: #{tpu_custom_call.1} parent=1 // pred_check_branch
      %28 = sbr.rel (0) target = $region13
    $region12: #{tpu_custom_call.1} parent=1 // pred_region
      _
    $region13: #{tpu_custom_call.1} parent=1 // pred_fallthru
      _
    // Predicated region
    $region14: #{tpu_custom_call.1} parent=1 // pred_check
      _
    $region15: #{tpu_custom_call.1} parent=1 // pred_check_branch
      %30 = sbr.rel (0) target = $region17
    $region16: #{tpu_custom_call.1} parent=1 // pred_region
      _
    $region17: #{tpu_custom_call.1} parent=1 // pred_fallthru
      _
    // Predicated region
    $region18: #{tpu_custom_call.1} parent=1 // pred_check
      _
    $region19: #{tpu_custom_call.1} parent=1 // pred_check_branch
      %32 = sbr.rel (0) target = $region21
    $region20: #{tpu_custom_call.1} parent=1 // pred_region
      _
    $region21: #{tpu_custom_call.1} parent=1 // pred_fallthru
      _
    // Predicated region
    $region22: #{tpu_custom_call.1} parent=1 // pred_check
      _
    $region23: #{tpu_custom_call.1} parent=1 // pred_check_branch
      %34 = sbr.rel (0) target = $region25
    $region24: #{tpu_custom_call.1} parent=1 // pred_region
      %36 = dma.done [#allocation5], 256
    $region25: #{tpu_custom_call.1} parent=1 // pred_fallthru
      _
    %p37 = scmp.eq.s32.totalorder 0, 0
    // Predicated region
    $region26: #{tpu_custom_call.1} parent=1 // pred_check
      %p38 = pneg %p37
    $region27: #{tpu_custom_call.1} parent=1 // pred_check_branch
      %40 = sbr.rel (%p38) target = $region29
    $region28: #{tpu_custom_call.1} parent=1 // pred_region
      %41 = vst [vmem:[#allocation2] sm:$0xff] 0.0
      %42 = vst [vmem:[#allocation2 + $0x8] sm:$0xff] 0.0
      %vm43 = vcmask 64512
      %44 = vst.msk [vmem:[#allocation3] sm:$0xff] %vm43, 0.0
      %45 = vst.msk [vmem:[#allocation3 + $0x8] sm:$0xff] %vm43, 0.0
    $region29: #{tpu_custom_call.1} parent=1 // pred_fallthru
      _
    %v46 = vld [vmem:[#allocation4] sm:$0xff]
    %v47 = vld [vmem:[#allocation4 + $0x8] sm:$0xff]
    %v48 = vld [vmem:[#allocation2] sm:$0xff]
    %v49 = vld [vmem:[#allocation2 + $0x8] sm:$0xff]
    %v50 = vld [vmem:[%s1] sm:$0xff]
    %v51 = vld [vmem:[%s1 + $0x8] sm:$0xff]
    %v52 = vld [vmem:[%s1 + $0x10] sm:$0xff]
    %v53 = vld [vmem:[%s1 + $0x18] sm:$0xff]
    %v54 = vld [vmem:[%s1 + $0x20] sm:$0xff]
    %v55 = vld [vmem:[%s1 + $0x28] sm:$0xff]
    %v56 = vld [vmem:[%s1 + $0x30] sm:$0xff]
    %v57 = vld [vmem:[%s1 + $0x38] sm:$0xff]
    %v58 = vld [vmem:[%s1 + $0x40] sm:$0xff]
    %v59 = vld [vmem:[%s1 + $0x48] sm:$0xff]
    %v60 = vld [vmem:[%s1 + $0x50] sm:$0xff]
    %v61 = vld [vmem:[%s1 + $0x58] sm:$0xff]
    %v62 = vld [vmem:[%s1 + $0x60] sm:$0xff]
    %v63 = vld [vmem:[%s1 + $0x68] sm:$0xff]
    %v64 = vld [vmem:[%s1 + $0x70] sm:$0xff]
    %v65 = vld [vmem:[%s1 + $0x78] sm:$0xff]
    %66 = vmatpush.msra.mxu0 %v65
    %67 = vmatpush.msra.mxu0 %v64
    %68 = vmatpush.msra.mxu0 %v63
    %69 = vmatpush.msra.mxu0 %v62
    %70 = vmatpush.msra.mxu0 %v61
    %71 = vmatpush.msra.mxu0 %v60
    %72 = vmatpush.msra.mxu0 %v59
    %73 = vmatpush.msra.mxu0 %v58
    %74 = vmatpush.msra.mxu0 %v57
    %75 = vmatpush.msra.mxu0 %v56
    %76 = vmatpush.msra.mxu0 %v55
    %77 = vmatpush.msra.mxu0 %v54
    %78 = vmatpush.msra.mxu0 %v53
    %79 = vmatpush.msra.mxu0 %v52
    %80 = vmatpush.msra.mxu0 %v51
    %81 = vmatpush.msra.mxu0 %v50
    %82 = vmatmul.f32.gmra.mxu0 %v46
    %v83 = vpop.f32.mrf.mxu0
    %v84 = vadd.f32 0.0, %v83
    %85 = vmatmul.f32.gmra.mxu0 %v47
    %v86 = vpop.f32.mrf.mxu0
    %v87 = vadd.f32 0.0, %v86
    %88 = vdwg.mxu0
    %v89 = vadd.f32 %v48, %v84
    %v90 = vadd.f32 %v49, %v87
    %91 = vst [vmem:[#allocation2] sm:$0xff] %v89
    %92 = vst [vmem:[#allocation2 + $0x8] sm:$0xff] %v90
    %v93 = vld [vmem:[#allocation3] sm:$0xff]
    %v94 = vld [vmem:[#allocation3 + $0x8] sm:$0xff]
    %v95 = vld [vmem:[%s3] sm:$0xff]
    %v96 = vld [vmem:[%s3 + $0x8] sm:$0xff]
    %v97 = vld [vmem:[%s3 + $0x10] sm:$0xff]
    %v98 = vld [vmem:[%s3 + $0x18] sm:$0xff]
    %v99 = vld [vmem:[%s3 + $0x20] sm:$0xff]
    %v100 = vld [vmem:[%s3 + $0x28] sm:$0xff]
    %v101 = vld [vmem:[%s3 + $0x30] sm:$0xff]
    %v102 = vld [vmem:[%s3 + $0x38] sm:$0xff]
    %v103 = vld [vmem:[%s3 + $0x40] sm:$0xff]
    %v104 = vld [vmem:[%s3 + $0x48] sm:$0xff]
    %v105 = vld [vmem:[%s3 + $0x50] sm:$0xff]
    %v106 = vld [vmem:[%s3 + $0x58] sm:$0xff]
    %v107 = vld [vmem:[%s3 + $0x60] sm:$0xff]
    %v108 = vld [vmem:[%s3 + $0x68] sm:$0xff]
    %v109 = vld [vmem:[%s3 + $0x70] sm:$0xff]
    %v110 = vld [vmem:[%s3 + $0x78] sm:$0xff]
    %111 = vmatpush.msra.mxu0 %v110
    %112 = vmatpush.msra.mxu0 %v109
    %113 = vmatpush.msra.mxu0 %v108
    %114 = vmatpush.msra.mxu0 %v107
    %115 = vmatpush.msra.mxu0 %v106
    %116 = vmatpush.msra.mxu0 %v105
    %117 = vmatpush.msra.mxu0 %v104
    %118 = vmatpush.msra.mxu0 %v103
    %119 = vmatpush.msra.mxu0 %v102
    %120 = vmatpush.msra.mxu0 %v101
    %121 = vmatpush.msra.mxu0 %v100
    %122 = vmatpush.msra.mxu0 %v99
    %123 = vmatpush.msra.mxu0 %v98
    %124 = vmatpush.msra.mxu0 %v97
    %125 = vmatpush.msra.mxu0 %v96
    %126 = vmatpush.msra.mxu0 %v95
    %127 = vmatmul.f32.gmra.mxu0 %v46
    %v128 = vpop.f32.mrf.mxu0
    %v129 = vadd.f32 0.0, %v128
    %130 = vmatmul.f32.gmra.mxu0 %v47
    %v131 = vpop.f32.mrf.mxu0
    %v132 = vadd.f32 0.0, %v131
    %133 = vdwg.mxu0
    %v134 = vadd.f32 %v93, %v129
    %v135 = vadd.f32 %v94, %v132
    %vm136 = vcmask 64512
    %137 = vst.msk [vmem:[#allocation3] sm:$0xff] %vm136, %v134
    %138 = vst.msk [vmem:[#allocation3 + $0x8] sm:$0xff] %vm136, %v135
    // Predicated region
    $region30: #{tpu_custom_call.1} parent=1 // pred_check
      %p139 = pneg %p37
    $region31: #{tpu_custom_call.1} parent=1 // pred_check_branch
      %141 = sbr.rel (%p139) target = $region33
    $region32: #{tpu_custom_call.1} parent=1 // pred_region
      %v142 = vld [vmem:[#allocation3] sm:$0xff]
      %v143 = vld [vmem:[#allocation3 + $0x8] sm:$0xff]
      %v144 = vmul.f32 %v142, 2.0
      %v145 = vmul.f32 %v143, 2.0
      %v146 = vld [vmem:[%s4] sm:$0xff]
      %v148 = vsel %vm136, %v144, 0
      %v151 = vsel %vm136, %v145, 0
      %153 = vmatpush.msra.mxu0 0.0
      %154 = vmatpush.msra.mxu0 0.0
      %155 = vmatpush.msra.mxu0 0.0
      %156 = vmatpush.msra.mxu0 0.0
      %157 = vmatpush.msra.mxu0 0.0
      %158 = vmatpush.msra.mxu0 0.0
      %159 = vmatpush.msra.mxu0 0.0
      %160 = vmatpush.msra.mxu0 0.0
      %161 = vmatpush.msra.mxu0 0.0
      %162 = vmatpush.msra.mxu0 0.0
      %163 = vmatpush.msra.mxu0 0.0
      %164 = vmatpush.msra.mxu0 0.0
      %165 = vmatpush.msra.mxu0 0.0
      %166 = vmatpush.msra.mxu0 0.0
      %167 = vmatpush.msra.mxu0 0.0
      %168 = vmatpush.msra.mxu0 %v146
      %169 = vmatmul.f32.gmra.mxu0 %v148
      %v170 = vpop.f32.mrf.mxu0
      %v171 = vadd.f32 0.0, %v170
      %172 = vmatmul.f32.gmra.mxu0 %v151
      %v173 = vpop.f32.mrf.mxu0
      %v174 = vadd.f32 0.0, %v173
      %175 = vdwg.mxu0
      %v176 = vld [vmem:[#allocation2] sm:$0xff]
      %v177 = vld [vmem:[#allocation2 + $0x8] sm:$0xff]
      %v178 = vadd.f32 %v176, %v171
      %v179 = vadd.f32 %v177, %v174
      %v180 = vld [vmem:[%s2] sm:$0x1]
      %v182 = vperm.slane %v180, 0
      %v184 = vadd.f32 %v178, %v182
      %v185 = vadd.f32 %v179, %v182
      %186 = vst [vmem:[#allocation7] sm:$0xff] %v184
      %187 = vst [vmem:[#allocation7 + $0x8] sm:$0xff] %v185
    $region33: #{tpu_custom_call.1} parent=1 // pred_fallthru
      _
    // Predicated region
    $region34: #{tpu_custom_call.1} parent=1 // pred_check
      _
    $region35: #{tpu_custom_call.1} parent=1 // pred_check_branch
      %189 = sbr.rel (0) target = $region37
    $region36: #{tpu_custom_call.1} parent=1 // pred_region
      %191 = vsyncadd [#allocation6], 0
      %s192 = sshll.u32 [#allocation7], 4
      %s193 = int_to_ptr.vmem [resolvable:$true] %s192
      %s194 = sshll.u32 %s5, 4
      %s195 = int_to_ptr.hbm [resolvable:$true] %s194
      %200 = dma.vmem_to_hbm [thread:$0]  %s193, 256, %s195, [#allocation6], 128, 128, 8
    $region37: #{tpu_custom_call.1} parent=1 // pred_fallthru
      _
    // Predicated region
    $region38: #{tpu_custom_call.1} parent=1 // pred_check
      _
    $region39: #{tpu_custom_call.1} parent=1 // pred_check_branch
      %202 = sbr.rel (0) target = $region41
    $region40: #{tpu_custom_call.1} parent=1 // pred_region
      %204 = dma.done [#allocation6], 256
    $region41: #{tpu_custom_call.1} parent=1 // pred_fallthru
      _
    %205 = vsyncpa [#allocation5], 1
    %206 = vsyncpa [#allocation6], 1

</llo_original>
